<compile_context>
chip_gen: v7x
topology: tpu7x:2x2x1
jax: 0.10.0
libtpu: 0.0.40
codegen_flags: <defaults>
</compile_context>

<pallas_src>
import functools
import math

import jax
import jax.numpy as jnp
from jax.experimental import pallas as pl
from jax.experimental.pallas import tpu as pltpu

_HALF_LOG_2PI = 0.5 * math.log(2.0 * math.pi)


def _softplus(x):
    # Overflow-free softplus: max(x, 0) + log1p(exp(-|x|)).
    return jnp.maximum(x, 0.0) + jnp.log1p(jnp.exp(-jnp.abs(x)))


def _normal_logprob(x, loc, scale):
    z = (x - loc) / scale
    return -0.5 * z * z - jnp.log(scale) - _HALF_LOG_2PI


def _mlp2(x_f32, w1_ref, b1_ref, w2_ref, b2_ref):
    """Two Linear+ReLU layers; bf16 operands on the MXU, f32 accumulation / bias / ReLU."""
    h = jnp.maximum(
        jnp.dot(x_f32.astype(jnp.bfloat16), w1_ref[...],
                preferred_element_type=jnp.float32) + b1_ref[...], 0.0)
    h = jnp.maximum(
        jnp.dot(h.astype(jnp.bfloat16), w2_ref[...],
                preferred_element_type=jnp.float32) + b2_ref[...], 0.0)
    return h


# --------------------------------------------------------------------------------------
# Kernels
# --------------------------------------------------------------------------------------
def _encoder_kernel(x_ref, w1_ref, b1_ref, w2_ref, b2_ref, w3_ref, b3_ref,
                    mu_ref, qs_ref, *, latent_size):
    h = _mlp2(x_ref[...], w1_ref, b1_ref, w2_ref, b2_ref)
    enc = jnp.dot(h.astype(jnp.bfloat16), w3_ref[...],
                  preferred_element_type=jnp.float32) + b3_ref[...]   # (n, 2k), fused head
    mu_ref[...] = enc[:, :latent_size]
    # NOTE: faithful to the PyTorch module, q_scale has no epsilon floor.
    qs_ref[...] = _softplus(enc[:, latent_size:])


def _decoder_mean_kernel(z_ref, v1_ref, c1_ref, v2_ref, c2_ref, v3_ref, c3_ref,
                         means_ref, *, n_inputs):
    # L == 0 path: decode z = mu, emit only the predicted means (no softplus / log-probs).
    g = _mlp2(z_ref[...], v1_ref, c1_ref, v2_ref, c2_ref)
    dec = jnp.dot(g.astype(jnp.bfloat16), v3_ref[...],
                  preferred_element_type=jnp.float32) + c3_ref[...]   # (n, 2d)
    means_ref[...] = dec[:, :n_inputs]


def _iwae_decoder_kernel(eps_ref, mu_ref, qs_ref, x_ref, mask_ref,
                         v1_ref, c1_ref, v2_ref, c2_ref, v3_ref, c3_ref,
                         means_ref, scales_ref, logpx_ref, logpz_ref, logq_ref,
                         *, n_inputs):
    # One grid step == one importance sample. eps streams; everything else is resident.
    mu = mu_ref[...]                        # (n, k)
    qs = qs_ref[...]                        # (n, k)
    z = mu + qs * eps_ref[...]              # reparameterized sample, (n, k)

    g = _mlp2(z, v1_ref, c1_ref, v2_ref, c2_ref)
    dec = jnp.dot(g.astype(jnp.bfloat16), v3_ref[...],
                  preferred_element_type=jnp.float32) + c3_ref[...]   # (n, 2d), fused head
    means = dec[:, :n_inputs]
    scales = _softplus(dec[:, n_inputs:]) + 0.001

    means_ref[...] = means
    scales_ref[...] = scales

    x = x_ref[...]
    m = mask_ref[...]
    n = x.shape[0]

    # Row reductions; stored lane-dense as (1, n) slabs.
    logpx = jnp.sum(_normal_logprob(x, means, scales) * m, axis=1)     # (n,)
    logpz = jnp.sum(-0.5 * z * z - _HALF_LOG_2PI, axis=1)              # (n,)
    logq = jnp.sum(_normal_logprob(z, mu, qs), axis=1)                 # (n,)
    logpx_ref[...] = logpx.reshape(1, n)
    logpz_ref[...] = logpz.reshape(1, n)
    logq_ref[...] = logq.reshape(1, n)


# --------------------------------------------------------------------------------------
# Wrapper
# --------------------------------------------------------------------------------------
def miwae_forward(iota_x, mask, L, params, key=None):
    """Mirrors MIWAE.forward.

    If L > 0: returns ((means, scales), logpxobsgivenz, logpz, logq) where (means, scales)
              (each (L, n, d)) parametrize the Normal of x given z and the log-probs are (L, n).
    If L == 0: returns the predicted means of x, shape (n, d).
    """
    n, d = iota_x.shape
    two_k = params["enc_w3"].shape[1]
    k = two_k // 2
    width = params["enc_w1"].shape[1]

    # ---- encoder: one small pallas_call (invariant across importance samples) ----
    mu, q_scale = pl.pallas_call(
        functools.partial(_encoder_kernel, latent_size=k),
        out_shape=(jax.ShapeDtypeStruct((n, k), jnp.float32),
                   jax.ShapeDtypeStruct((n, k), jnp.float32)),
    )(iota_x, params["enc_w1"], params["enc_b1"],
      params["enc_w2"], params["enc_b2"],
      params["enc_w3"], params["enc_b3"])

    dec_args = (params["dec_w1"], params["dec_b1"],
                params["dec_w2"], params["dec_b2"],
                params["dec_w3"], params["dec_b3"])

    if L == 0:
        # Specialized inference path: z = mu, means only.
        return pl.pallas_call(
            functools.partial(_decoder_mean_kernel, n_inputs=d),
            out_shape=jax.ShapeDtypeStruct((n, d), jnp.float32),
        )(mu, *dec_args)

    # ---- decoder: grid over L importance samples, parallel (megacore) semantics ----
    eps = jax.random.normal(key, (L, n, k), dtype=jnp.float32)

    def resident(shape):
        nd = len(shape)
        return pl.BlockSpec(shape, lambda i, _nd=nd: (0,) * _nd)

    in_specs = [
        pl.BlockSpec((None, n, k), lambda i: (i, 0, 0)),   # eps: streams one sample per step
        resident((n, k)),                                  # mu        (resident)
        resident((n, k)),                                  # q_scale   (resident)
        resident((n, d)),                                  # iota_x    (resident)
        resident((n, d)),                                  # mask      (resident)
        resident((k, width)), resident((1, width)),        # dec layer 1
        resident((width, width)), resident((1, width)),    # dec layer 2
        resident((width, 2 * d)), resident((1, 2 * d)),    # dec fused head
    ]
    out_specs = [
        pl.BlockSpec((None, n, d), lambda i: (i, 0, 0)),   # means
        pl.BlockSpec((None, n, d), lambda i: (i, 0, 0)),   # scales
        pl.BlockSpec((None, 1, n), lambda i: (i, 0, 0)),   # logpx  (lane-dense)
        pl.BlockSpec((None, 1, n), lambda i: (i, 0, 0)),   # logpz
        pl.BlockSpec((None, 1, n), lambda i: (i, 0, 0)),   # logq
    ]
    out_shape = (
        jax.ShapeDtypeStruct((L, n, d), jnp.float32),
        jax.ShapeDtypeStruct((L, n, d), jnp.float32),
        jax.ShapeDtypeStruct((L, 1, n), jnp.float32),
        jax.ShapeDtypeStruct((L, 1, n), jnp.float32),
        jax.ShapeDtypeStruct((L, 1, n), jnp.float32),
    )

    means, scales, logpx, logpz, logq = pl.pallas_call(
        functools.partial(_iwae_decoder_kernel, n_inputs=d),
        out_shape=out_shape,
        grid_spec=pltpu.PrefetchScalarGridSpec(
            num_scalar_prefetch=0,
            grid=(L,),
            in_specs=in_specs,
            out_specs=out_specs,
        ),
        compiler_params=pltpu.CompilerParams(
            dimension_semantics=("parallel",)),
    )(eps, mu, q_scale, iota_x, mask, *dec_args)

    # xgivenz is Normal(means, scales); we return its parameters.
    return ((means, scales),
            logpx.reshape(L, n),
            logpz.reshape(L, n),
            logq.reshape(L, n))


# --------------------------------------------------------------------------------------
# Parameter init (orthogonal weights like torch.nn.init.orthogonal_, PyTorch-default bias)
# --------------------------------------------------------------------------------------
def _init_linear(key, fan_in, fan_out):
    kw, kb = jax.random.split(key)
    rows, cols = max(fan_in, fan_out), min(fan_in, fan_out)
    a = jax.random.normal(kw, (rows, cols), dtype=jnp.float32)
    q, _ = jnp.linalg.qr(a)                      # orthonormal columns
    w = q if fan_in >= fan_out else q.T          # stored as (in, out)
    bound = 1.0 / math.sqrt(fan_in)
    b = jax.random.uniform(kb, (1, fan_out), jnp.float32, -bound, bound)
    return w.astype(jnp.float32), b


def init_miwae_params(key, n_inputs, width, latent_size):
    keys = jax.random.split(key, 6)
    ew1, eb1 = _init_linear(keys[0], n_inputs, width)
    ew2, eb2 = _init_linear(keys[1], width, width)
    ew3, eb3 = _init_linear(keys[2], width, 2 * latent_size)
    dw1, db1 = _init_linear(keys[3], latent_size, width)
    dw2, db2 = _init_linear(keys[4], width, width)
    dw3, db3 = _init_linear(keys[5], width, 2 * n_inputs)
    bf16 = jnp.bfloat16
    # Weights stored bf16 (MXU-native, halves weight DMA); biases stay f32.
    # TODO(synk): for production sizes pad width / latent_size / n_inputs to multiples of 128
    # so the MXU lane dims are unpadded; the demo sizes below are padding/overhead bound.
    return {
        "enc_w1": ew1.astype(bf16), "enc_b1": eb1,
        "enc_w2": ew2.astype(bf16), "enc_b2": eb2,
        "enc_w3": ew3.astype(bf16), "enc_b3": eb3,   # fused mu|sigma head
        "dec_w1": dw1.astype(bf16), "dec_b1": db1,
        "dec_w2": dw2.astype(bf16), "dec_b2": db2,
        "dec_w3": dw3.astype(bf16), "dec_b3": db3,   # fused mu|sigma head
    }


if __name__ == "__main__":
    n_inputs, width, latent_size = 8, 32, 4
    batch, L = 8, 3

    root = jax.random.PRNGKey(0)
    k_params, k_x, k_mask, k_eps = jax.random.split(root, 4)

    params = init_miwae_params(k_params, n_inputs, width, latent_size)

    x_full = jax.random.normal(k_x, (batch, n_inputs), dtype=jnp.float32)
    mask = (jax.random.uniform(k_mask, (batch, n_inputs)) > 0.3).astype(jnp.float32)
    iota_x = x_full * mask  # zero-filled missing entries

    # L > 0 branch: ((means, scales), logpxobsgivenz, logpz, logq)
    (means, scales), logpx, logpz, logq = miwae_forward(iota_x, mask, L, params, k_eps)
    jax.block_until_ready((means, scales, logpx, logpz, logq))
    assert means.shape == (L, batch, n_inputs)
    assert scales.shape == (L, batch, n_inputs)
    assert logpx.shape == (L, batch)
    assert logpz.shape == (L, batch)
    assert logq.shape == (L, batch)
    assert bool(jnp.all(jnp.isfinite(means)))
    assert bool(jnp.all(jnp.isfinite(scales)))
    assert bool(jnp.all(jnp.isfinite(logpx)))
    assert bool(jnp.all(jnp.isfinite(logpz)))
    assert bool(jnp.all(jnp.isfinite(logq)))
    assert bool(jnp.all(scales > 0.0))

    # L == 0 branch: predicted means of x
    xhat = miwae_forward(iota_x, mask, 0, params)
    jax.block_until_ready(xhat)
    assert xhat.shape == (batch, n_inputs)
    assert bool(jnp.all(jnp.isfinite(xhat)))

    print("KERNEL_OK")
</pallas_src>

<mosaic_0001>
module attributes {stable_mosaic.version = 11 : i64} {
  func.func @_encoder_kernel(%arg0: memref<8x8xf32, #tpu.memory_space<vmem>>, %arg1: memref<8x32xbf16, #tpu.memory_space<vmem>>, %arg2: memref<1x32xf32, #tpu.memory_space<vmem>>, %arg3: memref<32x32xbf16, #tpu.memory_space<vmem>>, %arg4: memref<1x32xf32, #tpu.memory_space<vmem>>, %arg5: memref<32x8xbf16, #tpu.memory_space<vmem>>, %arg6: memref<1x8xf32, #tpu.memory_space<vmem>>, %arg7: memref<8x4xf32, #tpu.memory_space<vmem>>, %arg8: memref<8x4xf32, #tpu.memory_space<vmem>>) attributes {dimension_semantics = [], scalar_prefetch = 0 : i64, scratch_operands = 0 : i64, tpu.core_type = #tpu.core_type<tc>} {
    %c0 = arith.constant 0 : index
    %c0_0 = arith.constant 0 : index
    %0 = vector.load %arg0[%c0, %c0_0] : memref<8x8xf32, #tpu.memory_space<vmem>>, vector<8x8xf32>
    %1 = arith.truncf %0 : vector<8x8xf32> to vector<8x8xbf16>
    %c0_1 = arith.constant 0 : index
    %c0_2 = arith.constant 0 : index
    %2 = vector.load %arg1[%c0_1, %c0_2] : memref<8x32xbf16, #tpu.memory_space<vmem>>, vector<8x32xbf16>
    %cst = arith.constant dense<0.000000e+00> : vector<8x32xf32>
    %3 = tpu.matmul %1, %2, %cst {dimension_numbers = #tpu.dot_dimension_numbers<[1], [0], [0], [1], [0, 0, 1, 1], [], []>} : vector<8x8xbf16>, vector<8x32xbf16>, vector<8x32xf32> -> vector<8x32xf32>
    %c0_3 = arith.constant 0 : index
    %c0_4 = arith.constant 0 : index
    %4 = vector.load %arg2[%c0_3, %c0_4] : memref<1x32xf32, #tpu.memory_space<vmem>>, vector<1x32xf32>
    %5 = vector.broadcast %4 : vector<1x32xf32> to vector<8x32xf32>
    %6 = arith.addf %3, %5 : vector<8x32xf32>
    %cst_5 = arith.constant 0.000000e+00 : f32
    %7 = vector.broadcast %cst_5 : f32 to vector<8x32xf32>
    %8 = arith.maximumf %6, %7 : vector<8x32xf32>
    %9 = arith.truncf %8 : vector<8x32xf32> to vector<8x32xbf16>
    %c0_6 = arith.constant 0 : index
    %c0_7 = arith.constant 0 : index
    %10 = vector.load %arg3[%c0_6, %c0_7] : memref<32x32xbf16, #tpu.memory_space<vmem>>, vector<32x32xbf16>
    %cst_8 = arith.constant dense<0.000000e+00> : vector<8x32xf32>
    %11 = tpu.matmul %9, %10, %cst_8 {dimension_numbers = #tpu.dot_dimension_numbers<[1], [0], [0], [1], [0, 0, 1, 1], [], []>} : vector<8x32xbf16>, vector<32x32xbf16>, vector<8x32xf32> -> vector<8x32xf32>
    %c0_9 = arith.constant 0 : index
    %c0_10 = arith.constant 0 : index
    %12 = vector.load %arg4[%c0_9, %c0_10] : memref<1x32xf32, #tpu.memory_space<vmem>>, vector<1x32xf32>
    %13 = vector.broadcast %12 : vector<1x32xf32> to vector<8x32xf32>
    %14 = arith.addf %11, %13 : vector<8x32xf32>
    %cst_11 = arith.constant 0.000000e+00 : f32
    %15 = vector.broadcast %cst_11 : f32 to vector<8x32xf32>
    %16 = arith.maximumf %14, %15 : vector<8x32xf32>
    %17 = arith.truncf %16 : vector<8x32xf32> to vector<8x32xbf16>
    %c0_12 = arith.constant 0 : index
    %c0_13 = arith.constant 0 : index
    %18 = vector.load %arg5[%c0_12, %c0_13] : memref<32x8xbf16, #tpu.memory_space<vmem>>, vector<32x8xbf16>
    %cst_14 = arith.constant dense<0.000000e+00> : vector<8x8xf32>
    %19 = tpu.matmul %17, %18, %cst_14 {dimension_numbers = #tpu.dot_dimension_numbers<[1], [0], [0], [1], [0, 0, 1, 1], [], []>} : vector<8x32xbf16>, vector<32x8xbf16>, vector<8x8xf32> -> vector<8x8xf32>
    %c0_15 = arith.constant 0 : index
    %c0_16 = arith.constant 0 : index
    %20 = vector.load %arg6[%c0_15, %c0_16] : memref<1x8xf32, #tpu.memory_space<vmem>>, vector<1x8xf32>
    %21 = vector.broadcast %20 : vector<1x8xf32> to vector<8x8xf32>
    %22 = arith.addf %19, %21 : vector<8x8xf32>
    %23 = vector.extract_strided_slice %22 {offsets = [0, 0], sizes = [8, 4], strides = [1, 1]} : vector<8x8xf32> to vector<8x4xf32>
    %c0_17 = arith.constant 0 : index
    %c0_18 = arith.constant 0 : index
    %24 = vector.load %arg7[%c0_17, %c0_18] : memref<8x4xf32, #tpu.memory_space<vmem>>, vector<8x4xf32>
    tpu.vector_store %arg7[%c0_17, %c0_18], %23 {strides = array<i32>} : memref<8x4xf32, #tpu.memory_space<vmem>>, vector<8x4xf32>,
    %25 = vector.extract_strided_slice %22 {offsets = [0, 4], sizes = [8, 4], strides = [1, 1]} : vector<8x8xf32> to vector<8x4xf32>
    %cst_19 = arith.constant 0.000000e+00 : f32
    %26 = vector.broadcast %cst_19 : f32 to vector<8x4xf32>
    %27 = arith.maximumf %25, %26 : vector<8x4xf32>
    %28 = math.absf %25 : vector<8x4xf32>
    %cst_20 = arith.constant 0.000000e+00 : f32
    %29 = vector.broadcast %cst_20 : f32 to vector<8x4xf32>
    %30 = arith.subf %29, %28 : vector<8x4xf32>
    %31 = math.exp %30 : vector<8x4xf32>
    %32 = math.log1p %31 : vector<8x4xf32>
    %33 = arith.addf %27, %32 : vector<8x4xf32>
    %c0_21 = arith.constant 0 : index
    %c0_22 = arith.constant 0 : index
    %34 = vector.load %arg8[%c0_21, %c0_22] : memref<8x4xf32, #tpu.memory_space<vmem>>, vector<8x4xf32>
    tpu.vector_store %arg8[%c0_21, %c0_22], %33 {strides = array<i32>} : memref<8x4xf32, #tpu.memory_space<vmem>>, vector<8x4xf32>,
    return
  }
}

</mosaic_0001>

<llo_original>
// kernel: tpu_custom_call.1
$region0: #{tpu_custom_call.1}
  #allocation0 [shape = 'u32[]', space=smem, size = 0x4, offset = 0x4, fixed_abs, tag = 'smem constant byte address 0x4 - core index']
  #allocation1 [shape = 'u32[144,128]{1,0:T(1,128)}', space=vmem, size = 0x12000, scoped, tag = 'internal scratch']
  %s0 = inlined_call_operand.vmem [shape: f32[8,8], index: 0, kind: input, shape index: {}]
  %s1 = inlined_call_operand.vmem [shape: bf16[8,32], index: 1, kind: input, shape index: {}]
  %s2 = inlined_call_operand.vmem [shape: f32[1,32], index: 2, kind: input, shape index: {}]
  %s3 = inlined_call_operand.vmem [shape: bf16[32,32], index: 3, kind: input, shape index: {}]
  %s4 = inlined_call_operand.vmem [shape: f32[1,32], index: 4, kind: input, shape index: {}]
  %s5 = inlined_call_operand.vmem [shape: bf16[32,8], index: 5, kind: input, shape index: {}]
  %s6 = inlined_call_operand.vmem [shape: f32[1,8], index: 6, kind: input, shape index: {}]
  %s7 = inlined_call_operand.vmem [shape: f32[8,4], index: 7, kind: output, shape index: {0}]
  %s8 = inlined_call_operand.vmem [shape: f32[8,4], index: 8, kind: output, shape index: {1}]
  %9 = xla_tuple %s7, %s8
  %s10 = sld [smem:[#allocation0]]
  $region46: #{tpu_custom_call.1} parent=0
    _
  %s12 = ssub.s32 1, %s10
  %s13 = scalar_select 0, %s12, %s10
  // Predicated region
  $region2: #{tpu_custom_call.1} parent=0 // pred_check
    _
  $region3: #{tpu_custom_call.1} parent=0 // pred_check_branch
    %15 = sbr.rel (0) target = $region5
  $region4: #{tpu_custom_call.1} parent=0 // pred_region
    _
  $region5: #{tpu_custom_call.1} parent=0 // pred_fallthru
    _
  // Predicated region
  $region6: #{tpu_custom_call.1} parent=0 // pred_check
    _
  $region7: #{tpu_custom_call.1} parent=0 // pred_check_branch
    %17 = sbr.rel (0) target = $region9
  $region8: #{tpu_custom_call.1} parent=0 // pred_region
    _
  $region9: #{tpu_custom_call.1} parent=0 // pred_fallthru
    _
  // Predicated region
  $region10: #{tpu_custom_call.1} parent=0 // pred_check
    _
  $region11: #{tpu_custom_call.1} parent=0 // pred_check_branch
    %19 = sbr.rel (0) target = $region13
  $region12: #{tpu_custom_call.1} parent=0 // pred_region
    _
  $region13: #{tpu_custom_call.1} parent=0 // pred_fallthru
    _
  // Predicated region
  $region14: #{tpu_custom_call.1} parent=0 // pred_check
    _
  $region15: #{tpu_custom_call.1} parent=0 // pred_check_branch
    %21 = sbr.rel (0) target = $region17
  $region16: #{tpu_custom_call.1} parent=0 // pred_region
    _
  $region17: #{tpu_custom_call.1} parent=0 // pred_fallthru
    _
  // Predicated region
  $region18: #{tpu_custom_call.1} parent=0 // pred_check
    _
  $region19: #{tpu_custom_call.1} parent=0 // pred_check_branch
    %23 = sbr.rel (0) target = $region21
  $region20: #{tpu_custom_call.1} parent=0 // pred_region
    _
  $region21: #{tpu_custom_call.1} parent=0 // pred_fallthru
    _
  // Predicated region
  $region22: #{tpu_custom_call.1} parent=0 // pred_check
    _
  $region23: #{tpu_custom_call.1} parent=0 // pred_check_branch
    %25 = sbr.rel (0) target = $region25
  $region24: #{tpu_custom_call.1} parent=0 // pred_region
    _
  $region25: #{tpu_custom_call.1} parent=0 // pred_fallthru
    _
  // Predicated region
  $region26: #{tpu_custom_call.1} parent=0 // pred_check
    _
  $region27: #{tpu_custom_call.1} parent=0 // pred_check_branch
    %27 = sbr.rel (0) target = $region29
  $region28: #{tpu_custom_call.1} parent=0 // pred_region
    _
  $region29: #{tpu_custom_call.1} parent=0 // pred_fallthru
    _
  %v29 = vld [vmem:[%s0] sm:$0xff]
  %v30 = vpack.c.bf16 %v29, %v29
  %v31 = vld [vmem:[%s1] sm:$0xf]
  %v32 = vld [vmem:[%s2] sm:$0x1]
  %v34 = vlaneseq
  %v35 = vshrl.u32 %v34, 7
  %v36 = vsub.s32 0, %v35
  %v37 = vrot.slane %v32, %v36
  %vm39 = vcmask 64512
  %v41 = vsel %vm39, %v30, 0
  %vm43 = vcmask 1043456
  %v45 = vsel %vm43, %v31, 0
  %47 = vmatprep.subr.bf16.mxu0 0
  %48 = vmatpush1.bf16.msra.mxu0 %v45
  %49 = vmatprep.subr.bf16.mxu0 0
  %50 = vmatpush1.bf16.msra.mxu0 0
  %51 = vmatprep.subr.bf16.mxu0 0
  %52 = vmatpush1.bf16.msra.mxu0 0
  %53 = vmatprep.subr.bf16.mxu0 0
  %54 = vmatpush1.bf16.msra.mxu0 0
  %55 = vmatprep.subr.bf16.mxu0 0
  %56 = vmatpush1.bf16.msra.mxu0 0
  %57 = vmatprep.subr.bf16.mxu0 0
  %58 = vmatpush1.bf16.msra.mxu0 0
  %59 = vmatprep.subr.bf16.mxu0 0
  %60 = vmatpush1.bf16.msra.mxu0 0
  %61 = vmatprep.subr.bf16.mxu0 0
  %62 = vmatpush1.bf16.msra.mxu0 0
  %63 = vmatprep.subr.bf16.mxu0 0
  %64 = vmatpush1.bf16.msra.mxu0 0
  %65 = vmatprep.subr.bf16.mxu0 0
  %66 = vmatpush1.bf16.msra.mxu0 0
  %67 = vmatprep.subr.bf16.mxu0 0
  %68 = vmatpush1.bf16.msra.mxu0 0
  %69 = vmatprep.subr.bf16.mxu0 0
  %70 = vmatpush1.bf16.msra.mxu0 0
  %71 = vmatprep.subr.bf16.mxu0 0
  %72 = vmatpush1.bf16.msra.mxu0 0
  %73 = vmatprep.subr.bf16.mxu0 0
  %74 = vmatpush1.bf16.msra.mxu0 0
  %75 = vmatprep.subr.bf16.mxu0 0
  %76 = vmatpush1.bf16.msra.mxu0 0
  %77 = vmatprep.subr.bf16.mxu0 0
  %78 = vmatpush1.bf16.msra.mxu0 0
  %79 = vmatprep.mubr.bf16.mxu0 0
  %80 = vmatmul.mubr.bf16.gmra.mrb[0].mxu0 %v41
  %v81 = vpop.f32.mrb[0].mxu0
  %v82 = vadd.f32 %v37, %v81
  %v83 = vpop.f32.mrb[0].mxu0
  %v84 = vpop.f32.mrb[0].mxu0
  %v85 = vpop.f32.mrb[0].mxu0
  %86 = vdwg.mxu0
  %v87 = vmax.f32 %v82, 0.0
  %v88 = vpack.c.bf16 %v87, %v87
  %v89 = vld [vmem:[%s3] sm:$0xf]
  %v90 = vld [vmem:[%s3 + $0x4] sm:$0xf]
  %v91 = vld [vmem:[%s3 + $0x8] sm:$0xf]
  %v92 = vld [vmem:[%s3 + $0xc] sm:$0xf]
  %v93 = vld [vmem:[%s4] sm:$0x1]
  %v95 = vlaneseq
  %v96 = vshrl.u32 %v95, 7
  %v97 = vsub.s32 0, %v96
  %v98 = vrot.slane %v93, %v97
  %v104 = vunpack.c.l.b16 %v89
  %v105 = vunpack.c.l.b16 %v90
  %v106 = vunpack.c.l.b16 %v91
  %v107 = vunpack.c.l.b16 %v92
  %v108 = vpack.c.b16 %v105, %v104
  %v109 = vpack.c.b16 %v107, %v106
  %vm112 = vcmask 261120
  %v114 = vsel %vm112, %v88, 0
  %116 = vmatprep.subr.bf16.mxu0 0
  %117 = vmatpush1.bf16.msra.mxu0 %v108
  %118 = vmatprep.subr.bf16.mxu0 0
  %119 = vmatpush1.bf16.msra.mxu0 %v109
  %120 = vmatprep.subr.bf16.mxu0 0
  %121 = vmatpush1.bf16.msra.mxu0 0
  %122 = vmatprep.subr.bf16.mxu0 0
  %123 = vmatpush1.bf16.msra.mxu0 0
  %124 = vmatprep.subr.bf16.mxu0 0
  %125 = vmatpush1.bf16.msra.mxu0 0
  %126 = vmatprep.subr.bf16.mxu0 0
  %127 = vmatpush1.bf16.msra.mxu0 0
  %128 = vmatprep.subr.bf16.mxu0 0
  %129 = vmatpush1.bf16.msra.mxu0 0
  %130 = vmatprep.subr.bf16.mxu0 0
  %131 = vmatpush1.bf16.msra.mxu0 0
  %132 = vmatprep.subr.bf16.mxu0 0
  %133 = vmatpush1.bf16.msra.mxu0 0
  %134 = vmatprep.subr.bf16.mxu0 0
  %135 = vmatpush1.bf16.msra.mxu0 0
  %136 = vmatprep.subr.bf16.mxu0 0
  %137 = vmatpush1.bf16.msra.mxu0 0
  %138 = vmatprep.subr.bf16.mxu0 0
  %139 = vmatpush1.bf16.msra.mxu0 0
  %140 = vmatprep.subr.bf16.mxu0 0
  %141 = vmatpush1.bf16.msra.mxu0 0
  %142 = vmatprep.subr.bf16.mxu0 0
  %143 = vmatpush1.bf16.msra.mxu0 0
  %144 = vmatprep.subr.bf16.mxu0 0
  %145 = vmatpush1.bf16.msra.mxu0 0
  %146 = vmatprep.subr.bf16.mxu0 0
  %147 = vmatpush1.bf16.msra.mxu0 0
  %148 = vmatprep.mubr.bf16.mxu0 0
  %149 = vmatmul.mubr.bf16.gmra.mrb[0].mxu0 %v114
  %v150 = vpop.f32.mrb[0].mxu0
  %v151 = vadd.f32 %v98, %v150
  %v152 = vpop.f32.mrb[0].mxu0
  %v153 = vpop.f32.mrb[0].mxu0
  %v154 = vpop.f32.mrb[0].mxu0
  %155 = vdwg.mxu0
  %v156 = vmax.f32 %v151, 0.0
  %v157 = vpack.c.bf16 %v156, %v156
  %v158 = vld [vmem:[%s5] sm:$0xf]
  %v159 = vld [vmem:[%s5 + $0x4] sm:$0xf]
  %v160 = vld [vmem:[%s5 + $0x8] sm:$0xf]
  %v161 = vld [vmem:[%s5 + $0xc] sm:$0xf]
  %v162 = vld [vmem:[%s6] sm:$0x1]
  %v164 = vlaneseq
  %v165 = vshrl.u32 %v164, 7
  %v166 = vsub.s32 0, %v165
  %v167 = vrot.slane %v162, %v166
  %v173 = vunpack.c.l.b16 %v158
  %v174 = vunpack.c.l.b16 %v159
  %v175 = vunpack.c.l.b16 %v160
  %v176 = vunpack.c.l.b16 %v161
  %v177 = vpack.c.b16 %v174, %v173
  %v178 = vpack.c.b16 %v176, %v175
  %v182 = vsel %vm112, %v157, 0
  %184 = vmatprep.subr.bf16.mxu0 0
  %185 = vmatpush1.bf16.msra.mxu0 %v177
  %186 = vmatprep.subr.bf16.mxu0 0
  %187 = vmatpush1.bf16.msra.mxu0 %v178
  %188 = vmatprep.subr.bf16.mxu0 0
  %189 = vmatpush1.bf16.msra.mxu0 0
  %190 = vmatprep.subr.bf16.mxu0 0
  %191 = vmatpush1.bf16.msra.mxu0 0
  %192 = vmatprep.subr.bf16.mxu0 0
  %193 = vmatpush1.bf16.msra.mxu0 0
  %194 = vmatprep.subr.bf16.mxu0 0
  %195 = vmatpush1.bf16.msra.mxu0 0
  %196 = vmatprep.subr.bf16.mxu0 0
  %197 = vmatpush1.bf16.msra.mxu0 0
  %198 = vmatprep.subr.bf16.mxu0 0
  %199 = vmatpush1.bf16.msra.mxu0 0
  %200 = vmatprep.subr.bf16.mxu0 0
  %201 = vmatpush1.bf16.msra.mxu0 0
  %202 = vmatprep.subr.bf16.mxu0 0
  %203 = vmatpush1.bf16.msra.mxu0 0
  %204 = vmatprep.subr.bf16.mxu0 0
  %205 = vmatpush1.bf16.msra.mxu0 0
  %206 = vmatprep.subr.bf16.mxu0 0
  %207 = vmatpush1.bf16.msra.mxu0 0
  %208 = vmatprep.subr.bf16.mxu0 0
  %209 = vmatpush1.bf16.msra.mxu0 0
  %210 = vmatprep.subr.bf16.mxu0 0
  %211 = vmatpush1.bf16.msra.mxu0 0
  %212 = vmatprep.subr.bf16.mxu0 0
  %213 = vmatpush1.bf16.msra.mxu0 0
  %214 = vmatprep.subr.bf16.mxu0 0
  %215 = vmatpush1.bf16.msra.mxu0 0
  %216 = vmatprep.mubr.bf16.mxu0 0
  %217 = vmatmul.mubr.bf16.gmra.mrb[0].mxu0 %v182
  %v218 = vpop.f32.mrb[0].mxu0
  %v219 = vadd.f32 %v167, %v218
  %v220 = vpop.f32.mrb[0].mxu0
  %v221 = vpop.f32.mrb[0].mxu0
  %v222 = vpop.f32.mrb[0].mxu0
  %223 = vdwg.mxu0
  %vm224 = vcmask 31744
  %225 = vst.msk [vmem:[%s7] sm:$0xff] %vm224, %v219
  %v226 = vmax.f32 %v219, 0.0
  %v227 = vand.u32 2147483647, %v219
  %v228 = vsub.f32 0.0, %v227
  %v229 = vmul.f32 %v228, 1.442695
  %v230 = vpow.pop %v229
  %v231 = vadd.f32 %v230, 1.0
  %v232 = vlog2.pop %v231
  %v233 = vmul.f32 %v232, 0.6931472
  %v234 = vmul.f32 -0.5, %v230
  %v235 = vadd.f32 %v234, 1.0
  %v236 = vmul.f32 %v235, %v230
  %v237 = vand.u32 2147483647, %v230
  %vm238 = vcmp.lt.f32.partialorder %v237, 0.0004427343
  %v239 = vsel %vm238, %v236, %v233
  %v240 = vadd.f32 %v226, %v239
  %242 = vrot.lane.b32.xlu0 %v240, 124
  %v243 = vpop.permute.xlu0 %242
  %245 = vst.msk [vmem:[%s8] sm:$0xff] %vm224, %v243
  // Predicated region
  $region30: #{tpu_custom_call.1} parent=0 // pred_check
    _
  $region31: #{tpu_custom_call.1} parent=0 // pred_check_branch
    %247 = sbr.rel (0) target = $region33
  $region32: #{tpu_custom_call.1} parent=0 // pred_region
    _
  $region33: #{tpu_custom_call.1} parent=0 // pred_fallthru
    _
  // Predicated region
  $region34: #{tpu_custom_call.1} parent=0 // pred_check
    _
  $region35: #{tpu_custom_call.1} parent=0 // pred_check_branch
    %249 = sbr.rel (0) target = $region37
  $region36: #{tpu_custom_call.1} parent=0 // pred_region
    _
  $region37: #{tpu_custom_call.1} parent=0 // pred_fallthru
    _
  // Predicated region
  $region38: #{tpu_custom_call.1} parent=0 // pred_check
    _
  $region39: #{tpu_custom_call.1} parent=0 // pred_check_branch
    %251 = sbr.rel (0) target = $region41
  $region40: #{tpu_custom_call.1} parent=0 // pred_region
    _
  $region41: #{tpu_custom_call.1} parent=0 // pred_fallthru
    _
  // Predicated region
  $region42: #{tpu_custom_call.1} parent=0 // pred_check
    _
  $region43: #{tpu_custom_call.1} parent=0 // pred_check_branch
    %253 = sbr.rel (0) target = $region45
  $region44: #{tpu_custom_call.1} parent=0 // pred_region
    _
  $region45: #{tpu_custom_call.1} parent=0 // pred_fallthru
    _

</llo_original>
